<compile_context>
chip_gen: v6e
topology: v6e:2x2x1
jax: 0.10.0
libtpu: 0.0.40
codegen_flags: <defaults>
</compile_context>

<pallas_src>
import functools
import math

import jax
import jax.numpy as jnp
from jax.experimental import pallas as pl
from jax.experimental.pallas import tpu as pltpu


def _round_up(x: int, m: int) -> int:
    return ((x + m - 1) // m) * m


def _pad_to(a, shape):
    pads = [(0, s - d) for d, s in zip(a.shape, shape)]
    if all(p == (0, 0) for p in pads):
        return a
    return jnp.pad(a, pads)


def _mlp_fused_kernel(x_ref, w_in_ref, b_in_ref, w_hid_ref, b_hid_ref,
                      w_out_ref, b_out_ref, o_ref, *, depth: int):
    """Fused MLP forward for one batch tile; activation stays in vregs/VMEM."""
    # Layer 0: [TB, Din_p] @ [Din_p, H_p] + b -> tanh  (MXU + VPU + EUP)
    h = jnp.dot(x_ref[...], w_in_ref[...], preferred_element_type=jnp.float32)
    h = jnp.tanh(h + b_in_ref[...])

    # `depth` hidden layers, statically unrolled over the stacked weight ref.
    for i in range(depth):
        w = w_hid_ref[i]            # [H_p, H_p]  (static index -> cheap view)
        b = b_hid_ref[i]            # [1, H_p]
        y = jnp.dot(h, w, preferred_element_type=jnp.float32)
        h = jnp.tanh(y + b)

    # Final layer, no activation.
    y = jnp.dot(h, w_out_ref[...], preferred_element_type=jnp.float32)
    o_ref[...] = (y + b_out_ref[...]).astype(o_ref.dtype)


def mlp_pallas(x, params):
    """x: [B, Din]; params: list of (w [fan_in, fan_out], b [1, fan_out])."""
    B, Din = x.shape
    n_layers = len(params)
    depth = n_layers - 2                       # number of hidden Linear(H,H)
    w_in, b_in = params[0]
    w_out, b_out = params[-1]
    H = w_in.shape[1]
    Dout = w_out.shape[1]

    LANE = 128
    SUBLANE = 8
    Din_p = _round_up(Din, LANE)
    H_p = _round_up(H, LANE)
    Dout_p = _round_up(Dout, LANE)
    # Batch tile: multiple of 8 (f32 sublane), capped at 256 to amortize the
    # ~0.35 us per-grid-step overhead while keeping activations vreg-sized.
    TB = min(256, _round_up(B, SUBLANE))
    B_p = _round_up(B, TB)

    # Lane-dense zero padding (exact: padded lanes stay identically zero).
    x_p = _pad_to(x, (B_p, Din_p))
    w_in_p = _pad_to(w_in, (Din_p, H_p))
    b_in_p = _pad_to(b_in.reshape(1, -1), (1, H_p))
    w_out_p = _pad_to(w_out, (H_p, Dout_p))
    b_out_p = _pad_to(b_out.reshape(1, -1), (1, Dout_p))

    if depth > 0:
        w_hid_p = jnp.stack([_pad_to(w, (H_p, H_p)) for (w, _) in params[1:-1]])
        b_hid_p = jnp.stack(
            [_pad_to(b.reshape(1, -1), (1, H_p)) for (_, b) in params[1:-1]])
    else:  # dummy (unrolled loop runs zero times, never read)
        w_hid_p = jnp.zeros((1, H_p, H_p), x.dtype)
        b_hid_p = jnp.zeros((1, 1, H_p), x.dtype)
    nh = w_hid_p.shape[0]

    kernel = functools.partial(_mlp_fused_kernel, depth=depth)
    grid = (B_p // TB,)

    out_p = pl.pallas_call(
        kernel,
        out_shape=jax.ShapeDtypeStruct((B_p, Dout_p), x.dtype),
        grid_spec=pltpu.PrefetchScalarGridSpec(
            num_scalar_prefetch=0,
            grid=grid,
            in_specs=[
                pl.BlockSpec((TB, Din_p), lambda i: (i, 0)),        # x tile
                pl.BlockSpec((Din_p, H_p), lambda i: (0, 0)),       # W_in (resident)
                pl.BlockSpec((1, H_p), lambda i: (0, 0)),           # b_in
                pl.BlockSpec((nh, H_p, H_p), lambda i: (0, 0, 0)),  # stacked W_hid
                pl.BlockSpec((nh, 1, H_p), lambda i: (0, 0, 0)),    # stacked b_hid
                pl.BlockSpec((H_p, Dout_p), lambda i: (0, 0)),      # W_out
                pl.BlockSpec((1, Dout_p), lambda i: (0, 0)),        # b_out
            ],
            out_specs=pl.BlockSpec((TB, Dout_p), lambda i: (i, 0)),
        ),
        compiler_params=pltpu.CompilerParams(
            dimension_semantics=("parallel",),
        ),
    )(x_p, w_in_p, b_in_p, w_hid_p, b_hid_p, w_out_p, b_out_p)

    return out_p[:B, :Dout]


def init_mlp_params(key, input_size, output_size, hidden_size, depth,
                    dtype=jnp.float32):
    """Init mimicking torch.nn.Linear default U(-1/sqrt(fan_in), +1/sqrt(fan_in)).

    Weights stored as [fan_in, fan_out] (transpose of torch's [out, in]); the
    forward semantics y = x @ W + b are identical to nn.Linear.
    """
    sizes = [(input_size, hidden_size)]
    sizes += [(hidden_size, hidden_size) for _ in range(depth)]
    sizes += [(hidden_size, output_size)]
    params = []
    for (fan_in, fan_out) in sizes:
        key, kw, kb = jax.random.split(key, 3)
        bound = 1.0 / math.sqrt(fan_in)
        w = jax.random.uniform(kw, (fan_in, fan_out), dtype, -bound, bound)
        b = jax.random.uniform(kb, (1, fan_out), dtype, -bound, bound)
        params.append((w, b))
    return params


def mlp_reference(x, params):
    """Pure-JAX reference: Linear -> Tanh -> (Linear -> Tanh)*depth -> Linear."""
    n = len(params)
    h = x
    for i, (w, b) in enumerate(params):
        h = h @ w + b
        if i != n - 1:
            h = jnp.tanh(h)
    return h


if __name__ == "__main__":
    input_size, output_size, hidden_size, depth = 4, 2, 32, 3
    batch = 8

    key = jax.random.PRNGKey(0)
    key, kx = jax.random.split(key)
    x = jax.random.normal(kx, (batch, input_size), jnp.float32)

    params = init_mlp_params(key, input_size, output_size, hidden_size, depth)

    out = jax.jit(mlp_pallas)(x, params)
    out = jax.block_until_ready(out)

    ref = mlp_reference(x, params)
    assert out.shape == (batch, output_size), out.shape
    assert jnp.allclose(out, ref, atol=1e-5, rtol=1e-5), "mismatch vs reference"

    print("KERNEL_OK")
</pallas_src>

<mosaic_0001>
module attributes {stable_mosaic.version = 11 : i64} {
  func.func @_mlp_fused_kernel(%arg0: i32, %arg1: memref<8x128xf32, #tpu.memory_space<vmem>>, %arg2: memref<128x128xf32, #tpu.memory_space<vmem>>, %arg3: memref<1x128xf32, #tpu.memory_space<vmem>>, %arg4: memref<3x128x128xf32, #tpu.memory_space<vmem>>, %arg5: memref<3x1x128xf32, #tpu.memory_space<vmem>>, %arg6: memref<128x128xf32, #tpu.memory_space<vmem>>, %arg7: memref<1x128xf32, #tpu.memory_space<vmem>>, %arg8: memref<8x128xf32, #tpu.memory_space<vmem>>) attributes {dimension_semantics = [#tpu.dimension_semantics<parallel>], iteration_bounds = array<i64: 1>, scalar_prefetch = 0 : i64, scratch_operands = 0 : i64, tpu.core_type = #tpu.core_type<tc>, window_params = [{transform_indices = @transform_0, window_bounds = array<i64: 8, 128>}, {pipeline_mode = #tpu.pipeline_mode<synchronous>, transform_indices = @transform_1, window_bounds = array<i64: 128, 128>}, {pipeline_mode = #tpu.pipeline_mode<synchronous>, transform_indices = @transform_2, window_bounds = array<i64: 1, 128>}, {pipeline_mode = #tpu.pipeline_mode<synchronous>, transform_indices = @transform_3, window_bounds = array<i64: 3, 128, 128>}, {pipeline_mode = #tpu.pipeline_mode<synchronous>, transform_indices = @transform_4, window_bounds = array<i64: 3, 1, 128>}, {pipeline_mode = #tpu.pipeline_mode<synchronous>, transform_indices = @transform_5, window_bounds = array<i64: 128, 128>}, {pipeline_mode = #tpu.pipeline_mode<synchronous>, transform_indices = @transform_6, window_bounds = array<i64: 1, 128>}, {transform_indices = @transform_7, window_bounds = array<i64: 8, 128>}]} {
    %c0 = arith.constant 0 : index
    %c0_0 = arith.constant 0 : index
    %0 = vector.load %arg1[%c0, %c0_0] : memref<8x128xf32, #tpu.memory_space<vmem>>, vector<8x128xf32>
    %c0_1 = arith.constant 0 : index
    %c0_2 = arith.constant 0 : index
    %1 = vector.load %arg2[%c0_1, %c0_2] : memref<128x128xf32, #tpu.memory_space<vmem>>, vector<128x128xf32>
    %cst = arith.constant dense<0.000000e+00> : vector<8x128xf32>
    %2 = tpu.matmul %0, %1, %cst {dimension_numbers = #tpu.dot_dimension_numbers<[1], [0], [0], [1], [0, 0, 1, 1], [], []>} : vector<8x128xf32>, vector<128x128xf32>, vector<8x128xf32> -> vector<8x128xf32>
    %c0_3 = arith.constant 0 : index
    %c0_4 = arith.constant 0 : index
    %3 = vector.load %arg3[%c0_3, %c0_4] : memref<1x128xf32, #tpu.memory_space<vmem>>, vector<1x128xf32>
    %4 = vector.broadcast %3 : vector<1x128xf32> to vector<8x128xf32>
    %5 = arith.addf %2, %4 : vector<8x128xf32>
    %6 = math.tanh %5 : vector<8x128xf32>
    %c0_5 = arith.constant 0 : index
    %c0_6 = arith.constant 0 : index
    %c0_7 = arith.constant 0 : index
    %7 = vector.load %arg4[%c0_5, %c0_6, %c0_7] : memref<3x128x128xf32, #tpu.memory_space<vmem>>, vector<1x128x128xf32>
    %8 = vector.shape_cast %7 : vector<1x128x128xf32> to vector<128x128xf32>
    %c0_8 = arith.constant 0 : index
    %c0_9 = arith.constant 0 : index
    %c0_10 = arith.constant 0 : index
    %9 = vector.load %arg5[%c0_8, %c0_9, %c0_10] : memref<3x1x128xf32, #tpu.memory_space<vmem>>, vector<1x1x128xf32>
    %10 = vector.shape_cast %9 : vector<1x1x128xf32> to vector<1x128xf32>
    %cst_11 = arith.constant dense<0.000000e+00> : vector<8x128xf32>
    %11 = tpu.matmul %6, %8, %cst_11 {dimension_numbers = #tpu.dot_dimension_numbers<[1], [0], [0], [1], [0, 0, 1, 1], [], []>} : vector<8x128xf32>, vector<128x128xf32>, vector<8x128xf32> -> vector<8x128xf32>
    %12 = vector.broadcast %10 : vector<1x128xf32> to vector<8x128xf32>
    %13 = arith.addf %11, %12 : vector<8x128xf32>
    %14 = math.tanh %13 : vector<8x128xf32>
    %c1 = arith.constant 1 : index
    %c0_12 = arith.constant 0 : index
    %c0_13 = arith.constant 0 : index
    %15 = vector.load %arg4[%c1, %c0_12, %c0_13] : memref<3x128x128xf32, #tpu.memory_space<vmem>>, vector<1x128x128xf32>
    %16 = vector.shape_cast %15 : vector<1x128x128xf32> to vector<128x128xf32>
    %c1_14 = arith.constant 1 : index
    %c0_15 = arith.constant 0 : index
    %c0_16 = arith.constant 0 : index
    %17 = vector.load %arg5[%c1_14, %c0_15, %c0_16] : memref<3x1x128xf32, #tpu.memory_space<vmem>>, vector<1x1x128xf32>
    %18 = vector.shape_cast %17 : vector<1x1x128xf32> to vector<1x128xf32>
    %cst_17 = arith.constant dense<0.000000e+00> : vector<8x128xf32>
    %19 = tpu.matmul %14, %16, %cst_17 {dimension_numbers = #tpu.dot_dimension_numbers<[1], [0], [0], [1], [0, 0, 1, 1], [], []>} : vector<8x128xf32>, vector<128x128xf32>, vector<8x128xf32> -> vector<8x128xf32>
    %20 = vector.broadcast %18 : vector<1x128xf32> to vector<8x128xf32>
    %21 = arith.addf %19, %20 : vector<8x128xf32>
    %22 = math.tanh %21 : vector<8x128xf32>
    %c2 = arith.constant 2 : index
    %c0_18 = arith.constant 0 : index
    %c0_19 = arith.constant 0 : index
    %23 = vector.load %arg4[%c2, %c0_18, %c0_19] : memref<3x128x128xf32, #tpu.memory_space<vmem>>, vector<1x128x128xf32>
    %24 = vector.shape_cast %23 : vector<1x128x128xf32> to vector<128x128xf32>
    %c2_20 = arith.constant 2 : index
    %c0_21 = arith.constant 0 : index
    %c0_22 = arith.constant 0 : index
    %25 = vector.load %arg5[%c2_20, %c0_21, %c0_22] : memref<3x1x128xf32, #tpu.memory_space<vmem>>, vector<1x1x128xf32>
    %26 = vector.shape_cast %25 : vector<1x1x128xf32> to vector<1x128xf32>
    %cst_23 = arith.constant dense<0.000000e+00> : vector<8x128xf32>
    %27 = tpu.matmul %22, %24, %cst_23 {dimension_numbers = #tpu.dot_dimension_numbers<[1], [0], [0], [1], [0, 0, 1, 1], [], []>} : vector<8x128xf32>, vector<128x128xf32>, vector<8x128xf32> -> vector<8x128xf32>
    %28 = vector.broadcast %26 : vector<1x128xf32> to vector<8x128xf32>
    %29 = arith.addf %27, %28 : vector<8x128xf32>
    %30 = math.tanh %29 : vector<8x128xf32>
    %c0_24 = arith.constant 0 : index
    %c0_25 = arith.constant 0 : index
    %31 = vector.load %arg6[%c0_24, %c0_25] : memref<128x128xf32, #tpu.memory_space<vmem>>, vector<128x128xf32>
    %cst_26 = arith.constant dense<0.000000e+00> : vector<8x128xf32>
    %32 = tpu.matmul %30, %31, %cst_26 {dimension_numbers = #tpu.dot_dimension_numbers<[1], [0], [0], [1], [0, 0, 1, 1], [], []>} : vector<8x128xf32>, vector<128x128xf32>, vector<8x128xf32> -> vector<8x128xf32>
    %c0_27 = arith.constant 0 : index
    %c0_28 = arith.constant 0 : index
    %33 = vector.load %arg7[%c0_27, %c0_28] : memref<1x128xf32, #tpu.memory_space<vmem>>, vector<1x128xf32>
    %34 = vector.broadcast %33 : vector<1x128xf32> to vector<8x128xf32>
    %35 = arith.addf %32, %34 : vector<8x128xf32>
    %c0_29 = arith.constant 0 : index
    %c0_30 = arith.constant 0 : index
    %36 = vector.load %arg8[%c0_29, %c0_30] : memref<8x128xf32, #tpu.memory_space<vmem>>, vector<8x128xf32>
    tpu.vector_store %arg8[%c0_29, %c0_30], %35 {strides = array<i32>} : memref<8x128xf32, #tpu.memory_space<vmem>>, vector<8x128xf32>,
    return
  }
  func.func @transform_0(%arg0: i32) -> (i32, i32) {
    %c0_i32 = arith.constant 0 : i32
    %c0_i32_0 = arith.constant 0 : i32
    return %arg0, %c0_i32 : i32, i32
  }
  func.func @transform_1(%arg0: i32) -> (i32, i32) {
    %c0_i32 = arith.constant 0 : i32
    %c0_i32_0 = arith.constant 0 : i32
    %c0_i32_1 = arith.constant 0 : i32
    return %c0_i32, %c0_i32_0 : i32, i32
  }
  func.func @transform_2(%arg0: i32) -> (i32, i32) {
    %c0_i32 = arith.constant 0 : i32
    %c0_i32_0 = arith.constant 0 : i32
    %c0_i32_1 = arith.constant 0 : i32
    return %c0_i32, %c0_i32_0 : i32, i32
  }
  func.func @transform_3(%arg0: i32) -> (i32, i32, i32) {
    %c0_i32 = arith.constant 0 : i32
    %c0_i32_0 = arith.constant 0 : i32
    %c0_i32_1 = arith.constant 0 : i32
    %c0_i32_2 = arith.constant 0 : i32
    return %c0_i32, %c0_i32_0, %c0_i32_1 : i32, i32, i32
  }
  func.func @transform_4(%arg0: i32) -> (i32, i32, i32) {
    %c0_i32 = arith.constant 0 : i32
    %c0_i32_0 = arith.constant 0 : i32
    %c0_i32_1 = arith.constant 0 : i32
    %c0_i32_2 = arith.constant 0 : i32
    return %c0_i32, %c0_i32_0, %c0_i32_1 : i32, i32, i32
  }
  func.func @transform_5(%arg0: i32) -> (i32, i32) {
    %c0_i32 = arith.constant 0 : i32
    %c0_i32_0 = arith.constant 0 : i32
    %c0_i32_1 = arith.constant 0 : i32
    return %c0_i32, %c0_i32_0 : i32, i32
  }
  func.func @transform_6(%arg0: i32) -> (i32, i32) {
    %c0_i32 = arith.constant 0 : i32
    %c0_i32_0 = arith.constant 0 : i32
    %c0_i32_1 = arith.constant 0 : i32
    return %c0_i32, %c0_i32_0 : i32, i32
  }
  func.func @transform_7(%arg0: i32) -> (i32, i32) {
    %c0_i32 = arith.constant 0 : i32
    %c0_i32_0 = arith.constant 0 : i32
    return %arg0, %c0_i32 : i32, i32
  }
}

</mosaic_0001>

<llo_original>
// kernel: mlp_pallas.1
$region0: #{mlp_pallas.1}
  #allocation0 [shape = 'u32[]', space=smem, size = 0x4, offset = 0x4, fixed_abs, tag = 'smem constant byte address 0x4 - core index']
  #allocation1 [shape = 'u32[144,128]{1,0:T(1,128)}', space=vmem, size = 0x12000, scoped, tag = 'internal scratch']
  %s0 = inlined_call_operand.vmem [shape: f32[8,128], index: 0, kind: input, shape index: {}]
  %s1 = inlined_call_operand.vmem [shape: f32[128,128], index: 1, kind: input, shape index: {}]
  %s2 = inlined_call_operand.vmem [shape: f32[1,128], index: 2, kind: input, shape index: {}]
  %s3 = inlined_call_operand.vmem [shape: f32[3,128,128], index: 3, kind: input, shape index: {}]
  %s4 = inlined_call_operand.vmem [shape: f32[3,1,128], index: 4, kind: input, shape index: {}]
  %s5 = inlined_call_operand.vmem [shape: f32[128,128], index: 5, kind: input, shape index: {}]
  %s6 = inlined_call_operand.vmem [shape: f32[1,128], index: 6, kind: input, shape index: {}]
  %s7 = inlined_call_operand.vmem [shape: f32[8,128], index: 7, kind: output, shape index: {}]
  %s8 = sld [smem:[#allocation0]]
  $region38: #{mlp_pallas.1} parent=0
    _
  %s10 = ssub.s32 1, %s8
  %s11 = scalar_select 0, %s10, %s8
  // Predicated region
  $region2: #{mlp_pallas.1} parent=0 // pred_check
    _
  $region3: #{mlp_pallas.1} parent=0 // pred_check_branch
    %13 = sbr.rel (0) target = $region5
  $region4: #{mlp_pallas.1} parent=0 // pred_region
    _
  $region5: #{mlp_pallas.1} parent=0 // pred_fallthru
    _
  // Predicated region
  $region6: #{mlp_pallas.1} parent=0 // pred_check
    _
  $region7: #{mlp_pallas.1} parent=0 // pred_check_branch
    %15 = sbr.rel (0) target = $region9
  $region8: #{mlp_pallas.1} parent=0 // pred_region
    _
  $region9: #{mlp_pallas.1} parent=0 // pred_fallthru
    _
  // Predicated region
  $region10: #{mlp_pallas.1} parent=0 // pred_check
    _
  $region11: #{mlp_pallas.1} parent=0 // pred_check_branch
    %17 = sbr.rel (0) target = $region13
  $region12: #{mlp_pallas.1} parent=0 // pred_region
    _
  $region13: #{mlp_pallas.1} parent=0 // pred_fallthru
    _
  // Predicated region
  $region14: #{mlp_pallas.1} parent=0 // pred_check
    _
  $region15: #{mlp_pallas.1} parent=0 // pred_check_branch
    %19 = sbr.rel (0) target = $region17
  $region16: #{mlp_pallas.1} parent=0 // pred_region
    _
  $region17: #{mlp_pallas.1} parent=0 // pred_fallthru
    _
  // Predicated region
  $region18: #{mlp_pallas.1} parent=0 // pred_check
    _
  $region19: #{mlp_pallas.1} parent=0 // pred_check_branch
    %21 = sbr.rel (0) target = $region21
  $region20: #{mlp_pallas.1} parent=0 // pred_region
    _
  $region21: #{mlp_pallas.1} parent=0 // pred_fallthru
    _
  // Predicated region
  $region22: #{mlp_pallas.1} parent=0 // pred_check
    _
  $region23: #{mlp_pallas.1} parent=0 // pred_check_branch
    %23 = sbr.rel (0) target = $region25
  $region24: #{mlp_pallas.1} parent=0 // pred_region
    _
  $region25: #{mlp_pallas.1} parent=0 // pred_fallthru
    _
  // Predicated region
  $region26: #{mlp_pallas.1} parent=0 // pred_check
    _
  $region27: #{mlp_pallas.1} parent=0 // pred_check_branch
    %25 = sbr.rel (0) target = $region29
  $region28: #{mlp_pallas.1} parent=0 // pred_region
    _
  $region29: #{mlp_pallas.1} parent=0 // pred_fallthru
    _
  %v26 = vld [vmem:[%s0] sm:$0xff]
  %v27 = vld [vmem:[%s1] sm:$0xff]
  %v28 = vld [vmem:[%s1 + $0x8] sm:$0xff]
  %v29 = vld [vmem:[%s1 + $0x10] sm:$0xff]
  %v30 = vld [vmem:[%s1 + $0x18] sm:$0xff]
  %v31 = vld [vmem:[%s1 + $0x20] sm:$0xff]
  %v32 = vld [vmem:[%s1 + $0x28] sm:$0xff]
  %v33 = vld [vmem:[%s1 + $0x30] sm:$0xff]
  %v34 = vld [vmem:[%s1 + $0x38] sm:$0xff]
  %v35 = vld [vmem:[%s1 + $0x40] sm:$0xff]
  %v36 = vld [vmem:[%s1 + $0x48] sm:$0xff]
  %v37 = vld [vmem:[%s1 + $0x50] sm:$0xff]
  %v38 = vld [vmem:[%s1 + $0x58] sm:$0xff]
  %v39 = vld [vmem:[%s1 + $0x60] sm:$0xff]
  %v40 = vld [vmem:[%s1 + $0x68] sm:$0xff]
  %v41 = vld [vmem:[%s1 + $0x70] sm:$0xff]
  %v42 = vld [vmem:[%s1 + $0x78] sm:$0xff]
  %v43 = vld [vmem:[%s2] sm:$0x1]
  %v45 = vlaneseq
  %v46 = vshrl.u32 %v45, 7
  %v47 = vsub.s32 0, %v46
  %v48 = vrot.slane %v43, %v47
  %50 = vmatprep.subr.mxu0 0.0
  %51 = vmatpush1.msra.mxu0 %v42
  %52 = vmatprep.subr.mxu0 0.0
  %53 = vmatpush1.msra.mxu0 %v41
  %54 = vmatprep.subr.mxu0 0.0
  %55 = vmatpush1.msra.mxu0 %v40
  %56 = vmatprep.subr.mxu0 0.0
  %57 = vmatpush1.msra.mxu0 %v39
  %58 = vmatprep.subr.mxu0 0.0
  %59 = vmatpush1.msra.mxu0 %v38
  %60 = vmatprep.subr.mxu0 0.0
  %61 = vmatpush1.msra.mxu0 %v37
  %62 = vmatprep.subr.mxu0 0.0
  %63 = vmatpush1.msra.mxu0 %v36
  %64 = vmatprep.subr.mxu0 0.0
  %65 = vmatpush1.msra.mxu0 %v35
  %66 = vmatprep.subr.mxu0 0.0
  %67 = vmatpush1.msra.mxu0 %v34
  %68 = vmatprep.subr.mxu0 0.0
  %69 = vmatpush1.msra.mxu0 %v33
  %70 = vmatprep.subr.mxu0 0.0
  %71 = vmatpush1.msra.mxu0 %v32
  %72 = vmatprep.subr.mxu0 0.0
  %73 = vmatpush1.msra.mxu0 %v31
  %74 = vmatprep.subr.mxu0 0.0
  %75 = vmatpush1.msra.mxu0 %v30
  %76 = vmatprep.subr.mxu0 0.0
  %77 = vmatpush1.msra.mxu0 %v29
  %78 = vmatprep.subr.mxu0 0.0
  %79 = vmatpush1.msra.mxu0 %v28
  %80 = vmatprep.subr.mxu0 0.0
  %81 = vmatpush1.msra.mxu0 %v27
  %82 = vmatprep.subr.mxu0 0.0
  %83 = vmatpush2.msra.mxu0 0.0
  %84 = vmatprep.subr.mxu0 0.0
  %85 = vmatpush2.msra.mxu0 0.0
  %86 = vmatprep.subr.mxu0 0.0
  %87 = vmatpush2.msra.mxu0 0.0
  %88 = vmatprep.subr.mxu0 0.0
  %89 = vmatpush2.msra.mxu0 0.0
  %90 = vmatprep.subr.mxu0 0.0
  %91 = vmatpush2.msra.mxu0 0.0
  %92 = vmatprep.subr.mxu0 0.0
  %93 = vmatpush2.msra.mxu0 0.0
  %94 = vmatprep.subr.mxu0 0.0
  %95 = vmatpush2.msra.mxu0 0.0
  %96 = vmatprep.subr.mxu0 0.0
  %97 = vmatpush2.msra.mxu0 0.0
  %98 = vmatprep.subr.mxu0 0.0
  %99 = vmatpush2.msra.mxu0 0.0
  %100 = vmatprep.subr.mxu0 0.0
  %101 = vmatpush2.msra.mxu0 0.0
  %102 = vmatprep.subr.mxu0 0.0
  %103 = vmatpush2.msra.mxu0 0.0
  %104 = vmatprep.subr.mxu0 0.0
  %105 = vmatpush2.msra.mxu0 0.0
  %106 = vmatprep.subr.mxu0 0.0
  %107 = vmatpush2.msra.mxu0 0.0
  %108 = vmatprep.subr.mxu0 0.0
  %109 = vmatpush2.msra.mxu0 0.0
  %110 = vmatprep.subr.mxu0 0.0
  %111 = vmatpush2.msra.mxu0 0.0
  %112 = vmatprep.subr.mxu0 0.0
  %113 = vmatpush2.msra.mxu0 0.0
  %114 = vmatprep.mubr.f32.mxu0 0.0
  %115 = vmatmul.mubr.f32.gmra.mxu0 %v26
  %v116 = vpop.f32.mrf.mxu0
  %v117 = vadd.f32 %v48, %v116
  %v118 = vpop.f32.mrf.mxu0
  %119 = vdwg.mxu0
  %v120 = vtanh.pop %v117
  %v121 = vld [vmem:[%s3] sm:$0xff]
  %v122 = vld [vmem:[%s3 + $0x8] sm:$0xff]
  %v123 = vld [vmem:[%s3 + $0x10] sm:$0xff]
  %v124 = vld [vmem:[%s3 + $0x18] sm:$0xff]
  %v125 = vld [vmem:[%s3 + $0x20] sm:$0xff]
  %v126 = vld [vmem:[%s3 + $0x28] sm:$0xff]
  %v127 = vld [vmem:[%s3 + $0x30] sm:$0xff]
  %v128 = vld [vmem:[%s3 + $0x38] sm:$0xff]
  %v129 = vld [vmem:[%s3 + $0x40] sm:$0xff]
  %v130 = vld [vmem:[%s3 + $0x48] sm:$0xff]
  %v131 = vld [vmem:[%s3 + $0x50] sm:$0xff]
  %v132 = vld [vmem:[%s3 + $0x58] sm:$0xff]
  %v133 = vld [vmem:[%s3 + $0x60] sm:$0xff]
  %v134 = vld [vmem:[%s3 + $0x68] sm:$0xff]
  %v135 = vld [vmem:[%s3 + $0x70] sm:$0xff]
  %v136 = vld [vmem:[%s3 + $0x78] sm:$0xff]
  %v137 = vld [vmem:[%s4] sm:$0x1]
  %v139 = vlaneseq
  %v140 = vshrl.u32 %v139, 7
  %v141 = vsub.s32 0, %v140
  %v142 = vrot.slane %v137, %v141
  %144 = vmatprep.subr.mxu0 0.0
  %145 = vmatpush1.msra.mxu0 %v136
  %146 = vmatprep.subr.mxu0 0.0
  %147 = vmatpush1.msra.mxu0 %v135
  %148 = vmatprep.subr.mxu0 0.0
  %149 = vmatpush1.msra.mxu0 %v134
  %150 = vmatprep.subr.mxu0 0.0
  %151 = vmatpush1.msra.mxu0 %v133
  %152 = vmatprep.subr.mxu0 0.0
  %153 = vmatpush1.msra.mxu0 %v132
  %154 = vmatprep.subr.mxu0 0.0
  %155 = vmatpush1.msra.mxu0 %v131
  %156 = vmatprep.subr.mxu0 0.0
  %157 = vmatpush1.msra.mxu0 %v130
  %158 = vmatprep.subr.mxu0 0.0
  %159 = vmatpush1.msra.mxu0 %v129
  %160 = vmatprep.subr.mxu0 0.0
  %161 = vmatpush1.msra.mxu0 %v128
  %162 = vmatprep.subr.mxu0 0.0
  %163 = vmatpush1.msra.mxu0 %v127
  %164 = vmatprep.subr.mxu0 0.0
  %165 = vmatpush1.msra.mxu0 %v126
  %166 = vmatprep.subr.mxu0 0.0
  %167 = vmatpush1.msra.mxu0 %v125
  %168 = vmatprep.subr.mxu0 0.0
  %169 = vmatpush1.msra.mxu0 %v124
  %170 = vmatprep.subr.mxu0 0.0
  %171 = vmatpush1.msra.mxu0 %v123
  %172 = vmatprep.subr.mxu0 0.0
  %173 = vmatpush1.msra.mxu0 %v122
  %174 = vmatprep.subr.mxu0 0.0
  %175 = vmatpush1.msra.mxu0 %v121
  %176 = vmatprep.subr.mxu0 0.0
  %177 = vmatpush2.msra.mxu0 0.0
  %178 = vmatprep.subr.mxu0 0.0
  %179 = vmatpush2.msra.mxu0 0.0
  %180 = vmatprep.subr.mxu0 0.0
  %181 = vmatpush2.msra.mxu0 0.0
  %182 = vmatprep.subr.mxu0 0.0
  %183 = vmatpush2.msra.mxu0 0.0
  %184 = vmatprep.subr.mxu0 0.0
  %185 = vmatpush2.msra.mxu0 0.0
  %186 = vmatprep.subr.mxu0 0.0
  %187 = vmatpush2.msra.mxu0 0.0
  %188 = vmatprep.subr.mxu0 0.0
  %189 = vmatpush2.msra.mxu0 0.0
  %190 = vmatprep.subr.mxu0 0.0
  %191 = vmatpush2.msra.mxu0 0.0
  %192 = vmatprep.subr.mxu0 0.0
  %193 = vmatpush2.msra.mxu0 0.0
  %194 = vmatprep.subr.mxu0 0.0
  %195 = vmatpush2.msra.mxu0 0.0
  %196 = vmatprep.subr.mxu0 0.0
  %197 = vmatpush2.msra.mxu0 0.0
  %198 = vmatprep.subr.mxu0 0.0
  %199 = vmatpush2.msra.mxu0 0.0
  %200 = vmatprep.subr.mxu0 0.0
  %201 = vmatpush2.msra.mxu0 0.0
  %202 = vmatprep.subr.mxu0 0.0
  %203 = vmatpush2.msra.mxu0 0.0
  %204 = vmatprep.subr.mxu0 0.0
  %205 = vmatpush2.msra.mxu0 0.0
  %206 = vmatprep.subr.mxu0 0.0
  %207 = vmatpush2.msra.mxu0 0.0
  %208 = vmatprep.mubr.f32.mxu0 0.0
  %209 = vmatmul.mubr.f32.gmra.mxu0 %v120
  %v210 = vpop.f32.mrf.mxu0
  %v211 = vadd.f32 %v142, %v210
  %v212 = vpop.f32.mrf.mxu0
  %213 = vdwg.mxu0
  %v214 = vtanh.pop %v211
  %s215 = scalar_lea.vmem %s3, 128
  %v216 = vld [vmem:[%s215] sm:$0xff]
  %v217 = vld [vmem:[%s215 + $0x8] sm:$0xff]
  %v218 = vld [vmem:[%s215 + $0x10] sm:$0xff]
  %v219 = vld [vmem:[%s215 + $0x18] sm:$0xff]
  %v220 = vld [vmem:[%s215 + $0x20] sm:$0xff]
  %v221 = vld [vmem:[%s215 + $0x28] sm:$0xff]
  %v222 = vld [vmem:[%s215 + $0x30] sm:$0xff]
  %v223 = vld [vmem:[%s215 + $0x38] sm:$0xff]
  %v224 = vld [vmem:[%s215 + $0x40] sm:$0xff]
  %v225 = vld [vmem:[%s215 + $0x48] sm:$0xff]
  %v226 = vld [vmem:[%s215 + $0x50] sm:$0xff]
  %v227 = vld [vmem:[%s215 + $0x58] sm:$0xff]
  %v228 = vld [vmem:[%s215 + $0x60] sm:$0xff]
  %v229 = vld [vmem:[%s215 + $0x68] sm:$0xff]
  %v230 = vld [vmem:[%s215 + $0x70] sm:$0xff]
  %v231 = vld [vmem:[%s215 + $0x78] sm:$0xff]
  %s232 = scalar_lea.vmem %s4, 1
  %v233 = vld [vmem:[%s232] sm:$0x1]
  %v235 = vlaneseq
  %v236 = vshrl.u32 %v235, 7
  %v237 = vsub.s32 0, %v236
  %v238 = vrot.slane %v233, %v237
  %240 = vmatprep.subr.mxu0 0.0
  %241 = vmatpush1.msra.mxu0 %v231
  %242 = vmatprep.subr.mxu0 0.0
  %243 = vmatpush1.msra.mxu0 %v230
  %244 = vmatprep.subr.mxu0 0.0
  %245 = vmatpush1.msra.mxu0 %v229
  %246 = vmatprep.subr.mxu0 0.0
  %247 = vmatpush1.msra.mxu0 %v228
  %248 = vmatprep.subr.mxu0 0.0
  %249 = vmatpush1.msra.mxu0 %v227
  %250 = vmatprep.subr.mxu0 0.0
  %251 = vmatpush1.msra.mxu0 %v226
  %252 = vmatprep.subr.mxu0 0.0
  %253 = vmatpush1.msra.mxu0 %v225
  %254 = vmatprep.subr.mxu0 0.0
  %255 = vmatpush1.msra.mxu0 %v224
  %256 = vmatprep.subr.mxu0 0.0
  %257 = vmatpush1.msra.mxu0 %v223
  %258 = vmatprep.subr.mxu0 0.0
  %259 = vmatpush1.msra.mxu0 %v222
  %260 = vmatprep.subr.mxu0 0.0
  %261 = vmatpush1.msra.mxu0 %v221
  %262 = vmatprep.subr.mxu0 0.0
  %263 = vmatpush1.msra.mxu0 %v220
  %264 = vmatprep.subr.mxu0 0.0
  %265 = vmatpush1.msra.mxu0 %v219
  %266 = vmatprep.subr.mxu0 0.0
  %267 = vmatpush1.msra.mxu0 %v218
  %268 = vmatprep.subr.mxu0 0.0
  %269 = vmatpush1.msra.mxu0 %v217
  %270 = vmatprep.subr.mxu0 0.0
  %271 = vmatpush1.msra.mxu0 %v216
  %272 = vmatprep.subr.mxu0 0.0
  %273 = vmatpush2.msra.mxu0 0.0
  %274 = vmatprep.subr.mxu0 0.0
  %275 = vmatpush2.msra.mxu0 0.0
  %276 = vmatprep.subr.mxu0 0.0
  %277 = vmatpush2.msra.mxu0 0.0
  %278 = vmatprep.subr.mxu0 0.0
  %279 = vmatpush2.msra.mxu0 0.0
  %280 = vmatprep.subr.mxu0 0.0
  %281 = vmatpush2.msra.mxu0 0.0
  %282 = vmatprep.subr.mxu0 0.0
  %283 = vmatpush2.msra.mxu0 0.0
  %284 = vmatprep.subr.mxu0 0.0
  %285 = vmatpush2.msra.mxu0 0.0
  %286 = vmatprep.subr.mxu0 0.0
  %287 = vmatpush2.msra.mxu0 0.0
  %288 = vmatprep.subr.mxu0 0.0
  %289 = vmatpush2.msra.mxu0 0.0
  %290 = vmatprep.subr.mxu0 0.0
  %291 = vmatpush2.msra.mxu0 0.0
  %292 = vmatprep.subr.mxu0 0.0
  %293 = vmatpush2.msra.mxu0 0.0
  %294 = vmatprep.subr.mxu0 0.0
  %295 = vmatpush2.msra.mxu0 0.0
  %296 = vmatprep.subr.mxu0 0.0
  %297 = vmatpush2.msra.mxu0 0.0
  %298 = vmatprep.subr.mxu0 0.0
  %299 = vmatpush2.msra.mxu0 0.0
  %300 = vmatprep.subr.mxu0 0.0
  %301 = vmatpush2.msra.mxu0 0.0
  %302 = vmatprep.subr.mxu0 0.0
  %303 = vmatpush2.msra.mxu0 0.0
  %304 = vmatprep.mubr.f32.mxu0 0.0
  %305 = vmatmul.mubr.f32.gmra.mxu0 %v214
  %v306 = vpop.f32.mrf.mxu0
  %v307 = vadd.f32 %v238, %v306
  %v308 = vpop.f32.mrf.mxu0
  %309 = vdwg.mxu0
  %v310 = vtanh.pop %v307
  %s311 = scalar_lea.vmem %s3, 256
  %v312 = vld [vmem:[%s311] sm:$0xff]
  %v313 = vld [vmem:[%s311 + $0x8] sm:$0xff]
  %v314 = vld [vmem:[%s311 + $0x10] sm:$0xff]
  %v315 = vld [vmem:[%s311 + $0x18] sm:$0xff]
  %v316 = vld [vmem:[%s311 + $0x20] sm:$0xff]
  %v317 = vld [vmem:[%s311 + $0x28] sm:$0xff]
  %v318 = vld [vmem:[%s311 + $0x30] sm:$0xff]
  %v319 = vld [vmem:[%s311 + $0x38] sm:$0xff]
  %v320 = vld [vmem:[%s311 + $0x40] sm:$0xff]
  %v321 = vld [vmem:[%s311 + $0x48] sm:$0xff]
  %v322 = vld [vmem:[%s311 + $0x50] sm:$0xff]
  %v323 = vld [vmem:[%s311 + $0x58] sm:$0xff]
  %v324 = vld [vmem:[%s311 + $0x60] sm:$0xff]
  %v325 = vld [vmem:[%s311 + $0x68] sm:$0xff]
  %v326 = vld [vmem:[%s311 + $0x70] sm:$0xff]
  %v327 = vld [vmem:[%s311 + $0x78] sm:$0xff]
  %s328 = scalar_lea.vmem %s4, 2
  %v329 = vld [vmem:[%s328] sm:$0x1]
  %v331 = vlaneseq
  %v332 = vshrl.u32 %v331, 7
  %v333 = vsub.s32 0, %v332
  %v334 = vrot.slane %v329, %v333
  %336 = vmatprep.subr.mxu0 0.0
  %337 = vmatpush1.msra.mxu0 %v327
  %338 = vmatprep.subr.mxu0 0.0
  %339 = vmatpush1.msra.mxu0 %v326
  %340 = vmatprep.subr.mxu0 0.0
  %341 = vmatpush1.msra.mxu0 %v325
  %342 = vmatprep.subr.mxu0 0.0
  %343 = vmatpush1.msra.mxu0 %v324
  %344 = vmatprep.subr.mxu0 0.0
  %345 = vmatpush1.msra.mxu0 %v323
  %346 = vmatprep.subr.mxu0 0.0
  %347 = vmatpush1.msra.mxu0 %v322
  %348 = vmatprep.subr.mxu0 0.0
  %349 = vmatpush1.msra.mxu0 %v321
  %350 = vmatprep.subr.mxu0 0.0
  %351 = vmatpush1.msra.mxu0 %v320
  %352 = vmatprep.subr.mxu0 0.0
  %353 = vmatpush1.msra.mxu0 %v319
  %354 = vmatprep.subr.mxu0 0.0
  %355 = vmatpush1.msra.mxu0 %v318
  %356 = vmatprep.subr.mxu0 0.0
  %357 = vmatpush1.msra.mxu0 %v317
  %358 = vmatprep.subr.mxu0 0.0
  %359 = vmatpush1.msra.mxu0 %v316
  %360 = vmatprep.subr.mxu0 0.0
  %361 = vmatpush1.msra.mxu0 %v315
  %362 = vmatprep.subr.mxu0 0.0
  %363 = vmatpush1.msra.mxu0 %v314
  %364 = vmatprep.subr.mxu0 0.0
  %365 = vmatpush1.msra.mxu0 %v313
  %366 = vmatprep.subr.mxu0 0.0
  %367 = vmatpush1.msra.mxu0 %v312
  %368 = vmatprep.subr.mxu0 0.0
  %369 = vmatpush2.msra.mxu0 0.0
  %370 = vmatprep.subr.mxu0 0.0
  %371 = vmatpush2.msra.mxu0 0.0
  %372 = vmatprep.subr.mxu0 0.0
  %373 = vmatpush2.msra.mxu0 0.0
  %374 = vmatprep.subr.mxu0 0.0
  %375 = vmatpush2.msra.mxu0 0.0
  %376 = vmatprep.subr.mxu0 0.0
  %377 = vmatpush2.msra.mxu0 0.0
  %378 = vmatprep.subr.mxu0 0.0
  %379 = vmatpush2.msra.mxu0 0.0
  %380 = vmatprep.subr.mxu0 0.0
  %381 = vmatpush2.msra.mxu0 0.0
  %382 = vmatprep.subr.mxu0 0.0
  %383 = vmatpush2.msra.mxu0 0.0
  %384 = vmatprep.subr.mxu0 0.0
  %385 = vmatpush2.msra.mxu0 0.0
  %386 = vmatprep.subr.mxu0 0.0
  %387 = vmatpush2.msra.mxu0 0.0
  %388 = vmatprep.subr.mxu0 0.0
  %389 = vmatpush2.msra.mxu0 0.0
  %390 = vmatprep.subr.mxu0 0.0
  %391 = vmatpush2.msra.mxu0 0.0
  %392 = vmatprep.subr.mxu0 0.0
  %393 = vmatpush2.msra.mxu0 0.0
  %394 = vmatprep.subr.mxu0 0.0
  %395 = vmatpush2.msra.mxu0 0.0
  %396 = vmatprep.subr.mxu0 0.0
  %397 = vmatpush2.msra.mxu0 0.0
  %398 = vmatprep.subr.mxu0 0.0
  %399 = vmatpush2.msra.mxu0 0.0
  %400 = vmatprep.mubr.f32.mxu0 0.0
  %401 = vmatmul.mubr.f32.gmra.mxu0 %v310
  %v402 = vpop.f32.mrf.mxu0
  %v403 = vadd.f32 %v334, %v402
  %v404 = vpop.f32.mrf.mxu0
  %405 = vdwg.mxu0
  %v406 = vtanh.pop %v403
  %v407 = vld [vmem:[%s5] sm:$0xff]
  %v408 = vld [vmem:[%s5 + $0x8] sm:$0xff]
  %v409 = vld [vmem:[%s5 + $0x10] sm:$0xff]
  %v410 = vld [vmem:[%s5 + $0x18] sm:$0xff]
  %v411 = vld [vmem:[%s5 + $0x20] sm:$0xff]
  %v412 = vld [vmem:[%s5 + $0x28] sm:$0xff]
  %v413 = vld [vmem:[%s5 + $0x30] sm:$0xff]
  %v414 = vld [vmem:[%s5 + $0x38] sm:$0xff]
  %v415 = vld [vmem:[%s5 + $0x40] sm:$0xff]
  %v416 = vld [vmem:[%s5 + $0x48] sm:$0xff]
  %v417 = vld [vmem:[%s5 + $0x50] sm:$0xff]
  %v418 = vld [vmem:[%s5 + $0x58] sm:$0xff]
  %v419 = vld [vmem:[%s5 + $0x60] sm:$0xff]
  %v420 = vld [vmem:[%s5 + $0x68] sm:$0xff]
  %v421 = vld [vmem:[%s5 + $0x70] sm:$0xff]
  %v422 = vld [vmem:[%s5 + $0x78] sm:$0xff]
  %v423 = vld [vmem:[%s6] sm:$0x1]
  %v425 = vlaneseq
  %v426 = vshrl.u32 %v425, 7
  %v427 = vsub.s32 0, %v426
  %v428 = vrot.slane %v423, %v427
  %430 = vmatprep.subr.mxu0 0.0
  %431 = vmatpush1.msra.mxu0 %v422
  %432 = vmatprep.subr.mxu0 0.0
  %433 = vmatpush1.msra.mxu0 %v421
  %434 = vmatprep.subr.mxu0 0.0
  %435 = vmatpush1.msra.mxu0 %v420
  %436 = vmatprep.subr.mxu0 0.0
  %437 = vmatpush1.msra.mxu0 %v419
  %438 = vmatprep.subr.mxu0 0.0
  %439 = vmatpush1.msra.mxu0 %v418
  %440 = vmatprep.subr.mxu0 0.0
  %441 = vmatpush1.msra.mxu0 %v417
  %442 = vmatprep.subr.mxu0 0.0
  %443 = vmatpush1.msra.mxu0 %v416
  %444 = vmatprep.subr.mxu0 0.0
  %445 = vmatpush1.msra.mxu0 %v415
  %446 = vmatprep.subr.mxu0 0.0
  %447 = vmatpush1.msra.mxu0 %v414
  %448 = vmatprep.subr.mxu0 0.0
  %449 = vmatpush1.msra.mxu0 %v413
  %450 = vmatprep.subr.mxu0 0.0
  %451 = vmatpush1.msra.mxu0 %v412
  %452 = vmatprep.subr.mxu0 0.0
  %453 = vmatpush1.msra.mxu0 %v411
  %454 = vmatprep.subr.mxu0 0.0
  %455 = vmatpush1.msra.mxu0 %v410
  %456 = vmatprep.subr.mxu0 0.0
  %457 = vmatpush1.msra.mxu0 %v409
  %458 = vmatprep.subr.mxu0 0.0
  %459 = vmatpush1.msra.mxu0 %v408
  %460 = vmatprep.subr.mxu0 0.0
  %461 = vmatpush1.msra.mxu0 %v407
  %462 = vmatprep.subr.mxu0 0.0
  %463 = vmatpush2.msra.mxu0 0.0
  %464 = vmatprep.subr.mxu0 0.0
  %465 = vmatpush2.msra.mxu0 0.0
  %466 = vmatprep.subr.mxu0 0.0
  %467 = vmatpush2.msra.mxu0 0.0
  %468 = vmatprep.subr.mxu0 0.0
  %469 = vmatpush2.msra.mxu0 0.0
  %470 = vmatprep.subr.mxu0 0.0
  %471 = vmatpush2.msra.mxu0 0.0
  %472 = vmatprep.subr.mxu0 0.0
  %473 = vmatpush2.msra.mxu0 0.0
  %474 = vmatprep.subr.mxu0 0.0
  %475 = vmatpush2.msra.mxu0 0.0
  %476 = vmatprep.subr.mxu0 0.0
  %477 = vmatpush2.msra.mxu0 0.0
  %478 = vmatprep.subr.mxu0 0.0
  %479 = vmatpush2.msra.mxu0 0.0
  %480 = vmatprep.subr.mxu0 0.0
  %481 = vmatpush2.msra.mxu0 0.0
  %482 = vmatprep.subr.mxu0 0.0
  %483 = vmatpush2.msra.mxu0 0.0
  %484 = vmatprep.subr.mxu0 0.0
  %485 = vmatpush2.msra.mxu0 0.0
  %486 = vmatprep.subr.mxu0 0.0
  %487 = vmatpush2.msra.mxu0 0.0
  %488 = vmatprep.subr.mxu0 0.0
  %489 = vmatpush2.msra.mxu0 0.0
  %490 = vmatprep.subr.mxu0 0.0
  %491 = vmatpush2.msra.mxu0 0.0
  %492 = vmatprep.subr.mxu0 0.0
  %493 = vmatpush2.msra.mxu0 0.0
  %494 = vmatprep.mubr.f32.mxu0 0.0
  %495 = vmatmul.mubr.f32.gmra.mxu0 %v406
  %v496 = vpop.f32.mrf.mxu0
  %v497 = vadd.f32 %v428, %v496
  %v498 = vpop.f32.mrf.mxu0
  %499 = vdwg.mxu0
  %500 = vst [vmem:[%s7] sm:$0xff] %v497
  // Predicated region
  $region30: #{mlp_pallas.1} parent=0 // pred_check
    _
  $region31: #{mlp_pallas.1} parent=0 // pred_check_branch
    %502 = sbr.rel (0) target = $region33
  $region32: #{mlp_pallas.1} parent=0 // pred_region
    _
  $region33: #{mlp_pallas.1} parent=0 // pred_fallthru
    _
  // Predicated region
  $region34: #{mlp_pallas.1} parent=0 // pred_check
    _
  $region35: #{mlp_pallas.1} parent=0 // pred_check_branch
    %504 = sbr.rel (0) target = $region37
  $region36: #{mlp_pallas.1} parent=0 // pred_region
    _
  $region37: #{mlp_pallas.1} parent=0 // pred_fallthru
    _

</llo_original>
